<compile_context>
chip_gen: v6e
topology: v6e:2x2x1
jax: 0.10.0
libtpu: 0.0.40
codegen_flags: <defaults>
</compile_context>

<pallas_src>
import jax
import jax.numpy as jnp
from jax.experimental import pallas as pl
from jax.experimental.pallas import tpu as pltpu


def _graphconv_body(adj_ref, xs_ref, xd_ref, scale_ref, wrel_ref, wroot_ref,
                    brel_ref, o_ref, acc_ref, wcls_ref=None, bcls_ref=None):
    k = pl.program_id(1)

    @pl.when(k == 0)
    def _():
        acc_ref[...] = jnp.zeros_like(acc_ref)

    # Weighted neighbour aggregation: acc[i, :] += sum_j w_ij * x[j, :]
    acc_ref[...] += jnp.dot(adj_ref[...],                       # bf16 adjacency tile
                            xs_ref[...].astype(jnp.bfloat16),   # bf16 source feats
                            preferred_element_type=jnp.float32)

    @pl.when(k == pl.num_programs(1) - 1)
    def _():
        agg = acc_ref[...] * scale_ref[...]                     # mean (1/deg) or add (1)
        h = jnp.dot(agg.astype(jnp.bfloat16), wrel_ref[...],
                    preferred_element_type=jnp.float32)
        h += jnp.dot(xd_ref[...].astype(jnp.bfloat16), wroot_ref[...],
                     preferred_element_type=jnp.float32)
        h += brel_ref[...]
        h = jnp.maximum(h, 0.0)                                 # F.relu epilogue
        if wcls_ref is None:
            o_ref[...] = h
        else:
            # fused classifier: logits = relu(h2) @ W_cls + b_cls (128-lane padded)
            o_ref[...] = (jnp.dot(h.astype(jnp.bfloat16), wcls_ref[...],
                                  preferred_element_type=jnp.float32)
                          + bcls_ref[...])


def _make_graphconv_kernel(fuse_classifier):
    if fuse_classifier:
        def kernel(adj_ref, xs_ref, xd_ref, scale_ref, wrel_ref, wroot_ref,
                   brel_ref, wcls_ref, bcls_ref, o_ref, acc_ref):
            _graphconv_body(adj_ref, xs_ref, xd_ref, scale_ref, wrel_ref,
                            wroot_ref, brel_ref, o_ref, acc_ref,
                            wcls_ref=wcls_ref, bcls_ref=bcls_ref)
    else:
        def kernel(adj_ref, xs_ref, xd_ref, scale_ref, wrel_ref, wroot_ref,
                   brel_ref, o_ref, acc_ref):
            _graphconv_body(adj_ref, xs_ref, xd_ref, scale_ref, wrel_ref,
                            wroot_ref, brel_ref, o_ref, acc_ref)
    return kernel


def graphconv_layer(adj_bf16, x, scale, wrel, wroot, brel,
                    wcls=None, bcls=None, *, tm=128, tk=128):
    """One GraphConv layer (+ fused ReLU, optionally + fused Linear classifier)."""
    n, fin = x.shape
    h = wrel.shape[1]
    fuse = wcls is not None
    out_dim = wcls.shape[1] if fuse else h
    assert n % tm == 0 and n % tk == 0

    in_specs = [
        pl.BlockSpec((tm, tk), lambda i, k: (i, k)),           # adj_w[dst tile, src tile]
        pl.BlockSpec((tk, fin), lambda i, k: (k, 0)),          # x (source side)
        pl.BlockSpec((tm, fin), lambda i, k: (i, 0)),          # x (root / dst side)
        pl.BlockSpec((tm, 1), lambda i, k: (i, 0)),            # per-node aggregation scale
        pl.BlockSpec((fin, h), lambda i, k: (0, 0)),           # W_rel  (bf16)
        pl.BlockSpec((fin, h), lambda i, k: (0, 0)),           # W_root (bf16)
        pl.BlockSpec((1, h), lambda i, k: (0, 0)),             # b_rel  (f32)
    ]
    args = [adj_bf16, x, x, scale,
            wrel.astype(jnp.bfloat16), wroot.astype(jnp.bfloat16), brel]
    if fuse:
        in_specs += [
            pl.BlockSpec((h, out_dim), lambda i, k: (0, 0)),   # W_cls (bf16, lane-padded)
            pl.BlockSpec((1, out_dim), lambda i, k: (0, 0)),   # b_cls (f32, lane-padded)
        ]
        args += [wcls.astype(jnp.bfloat16), bcls]

    return pl.pallas_call(
        _make_graphconv_kernel(fuse),
        out_shape=jax.ShapeDtypeStruct((n, out_dim), jnp.float32),
        grid_spec=pltpu.PrefetchScalarGridSpec(
            num_scalar_prefetch=0,
            grid=(n // tm, n // tk),
            in_specs=in_specs,
            out_specs=pl.BlockSpec((tm, out_dim), lambda i, k: (i, 0)),
            scratch_shapes=[pltpu.VMEM((tm, fin), jnp.float32)],
        ),
        compiler_params=pltpu.CompilerParams(
            dimension_semantics=("parallel", "arbitrary"),
            vmem_limit_bytes=32 * 1024 * 1024,
        ),
    )(*args)


def init_graphconv_params(key, fin, fout):
    k1, k2, k3 = jax.random.split(key, 3)
    s = 1.0 / jnp.sqrt(jnp.float32(fin))
    return dict(
        wrel=jax.random.uniform(k1, (fin, fout), jnp.float32, -s, s),
        wroot=jax.random.uniform(k2, (fin, fout), jnp.float32, -s, s),
        brel=jax.random.uniform(k3, (1, fout), jnp.float32, -s, s),
    )


def weighted_graphsage_forward(params, x, adj_w, inv_deg, ones_scale, out_channels):
    p1, p2, pc = params["conv1"], params["conv2"], params["classifier"]
    # conv1 (aggr='mean', weighted) + ReLU
    h1 = graphconv_layer(adj_w, x, inv_deg,
                         p1["wrel"], p1["wroot"], p1["brel"])
    # TODO(synk): F.dropout is identity at inference; training-mode dropout not implemented.
    # conv2 (aggr='add', weighted) + ReLU + fused Linear classifier (lane-padded)
    logits_pad = graphconv_layer(adj_w, h1, ones_scale,
                                 p2["wrel"], p2["wroot"], p2["brel"],
                                 wcls=pc["w_pad"], bcls=pc["b_pad"])
    return logits_pad[:, :out_channels]


if __name__ == "__main__":
    N = 256
    in_channels = 32
    hidden_channels = 128
    out_channels = 8
    num_edges = 2048
    CLS_PAD = 128   # pad classifier output to a full lane width

    key = jax.random.PRNGKey(0)
    kx, ks, kd, kw, k1, k2, kc = jax.random.split(key, 7)

    x = jax.random.normal(kx, (N, in_channels), jnp.float32)
    src = jax.random.randint(ks, (num_edges,), 0, N)
    dst = jax.random.randint(kd, (num_edges,), 0, N)
    edge_index = jnp.stack([src, dst])                         # [2, E]
    edge_weight = jax.random.uniform(kw, (num_edges,), jnp.float32)

    # Densify: weighted adjacency adj_w[dst, src] (duplicate edges sum, as in
    # message passing).  Stored in bf16 to halve the O(N^2) footprint.
    adj_w = jnp.zeros((N, N), jnp.float32).at[dst, src].add(edge_weight)
    adj_w = adj_w.astype(jnp.bfloat16)
    # aggr='mean' divides by the in-degree message count (not the weight sum).
    deg = jnp.zeros((N,), jnp.float32).at[dst].add(1.0)
    inv_deg = jnp.where(deg > 0, 1.0 / deg, 0.0).reshape(N, 1)
    ones_scale = jnp.ones((N, 1), jnp.float32)                 # aggr='add' for conv2

    params = {
        "conv1": init_graphconv_params(k1, in_channels, hidden_channels),
        "conv2": init_graphconv_params(k2, hidden_channels, hidden_channels),
    }
    kcw, kcb = jax.random.split(kc)
    s = 1.0 / jnp.sqrt(jnp.float32(hidden_channels))
    w_cls = jax.random.uniform(kcw, (hidden_channels, out_channels), jnp.float32, -s, s)
    b_cls = jax.random.uniform(kcb, (1, out_channels), jnp.float32, -s, s)
    params["classifier"] = {
        "w_pad": jnp.zeros((hidden_channels, CLS_PAD), jnp.float32)
                 .at[:, :out_channels].set(w_cls),
        "b_pad": jnp.zeros((1, CLS_PAD), jnp.float32)
                 .at[:, :out_channels].set(b_cls),
    }

    logits = weighted_graphsage_forward(params, x, adj_w, inv_deg, ones_scale,
                                        out_channels)
    jax.block_until_ready(logits)
    assert logits.shape == (N, out_channels)
    assert bool(jnp.all(jnp.isfinite(logits)))
    print("KERNEL_OK")
</pallas_src>

<mosaic_0001>
module attributes {stable_mosaic.version = 11 : i64} {
  func.func @kernel(%arg0: i32, %arg1: i32, %arg2: memref<128x128xbf16, #tpu.memory_space<vmem>>, %arg3: memref<128x32xf32, #tpu.memory_space<vmem>>, %arg4: memref<128x32xf32, #tpu.memory_space<vmem>>, %arg5: memref<128x1xf32, #tpu.memory_space<vmem>>, %arg6: memref<32x128xbf16, #tpu.memory_space<vmem>>, %arg7: memref<32x128xbf16, #tpu.memory_space<vmem>>, %arg8: memref<1x128xf32, #tpu.memory_space<vmem>>, %arg9: memref<128x128xf32, #tpu.memory_space<vmem>>, %arg10: memref<128x32xf32, #tpu.memory_space<vmem>>) attributes {dimension_semantics = [#tpu.dimension_semantics<parallel>, #tpu.dimension_semantics<arbitrary>], iteration_bounds = array<i64: 2, 2>, scalar_prefetch = 0 : i64, scratch_operands = 1 : i64, tpu.core_type = #tpu.core_type<tc>, window_params = [{transform_indices = @transform_0, window_bounds = array<i64: 128, 128>}, {transform_indices = @transform_1, window_bounds = array<i64: 128, 32>}, {transform_indices = @transform_2, window_bounds = array<i64: 128, 32>}, {transform_indices = @transform_3, window_bounds = array<i64: 128, 1>}, {pipeline_mode = #tpu.pipeline_mode<synchronous>, transform_indices = @transform_4, window_bounds = array<i64: 32, 128>}, {pipeline_mode = #tpu.pipeline_mode<synchronous>, transform_indices = @transform_5, window_bounds = array<i64: 32, 128>}, {pipeline_mode = #tpu.pipeline_mode<synchronous>, transform_indices = @transform_6, window_bounds = array<i64: 1, 128>}, {transform_indices = @transform_7, window_bounds = array<i64: 128, 128>}]} {
    %c0_i32 = arith.constant 0 : i32
    %0 = arith.cmpi eq, %arg1, %c0_i32 : i32
    %1 = arith.extui %0 : i1 to i32
    %c0_i32_0 = arith.constant 0 : i32
    %2 = arith.cmpi ne, %1, %c0_i32_0 : i32
    scf.if %2 {
      %cst_9 = arith.constant 0.000000e+00 : f32
      %13 = vector.broadcast %cst_9 : f32 to vector<128x32xf32>
      %c0_10 = arith.constant 0 : index
      %c0_11 = arith.constant 0 : index
      %14 = vector.load %arg10[%c0_10, %c0_11] : memref<128x32xf32, #tpu.memory_space<vmem>>, vector<128x32xf32>
      tpu.vector_store %arg10[%c0_10, %c0_11], %13 {strides = array<i32>} : memref<128x32xf32, #tpu.memory_space<vmem>>, vector<128x32xf32>,
    } else {
    }
    %c0 = arith.constant 0 : index
    %c0_1 = arith.constant 0 : index
    %3 = vector.load %arg10[%c0, %c0_1] : memref<128x32xf32, #tpu.memory_space<vmem>>, vector<128x32xf32>
    %c0_2 = arith.constant 0 : index
    %c0_3 = arith.constant 0 : index
    %4 = vector.load %arg2[%c0_2, %c0_3] : memref<128x128xbf16, #tpu.memory_space<vmem>>, vector<128x128xbf16>
    %c0_4 = arith.constant 0 : index
    %c0_5 = arith.constant 0 : index
    %5 = vector.load %arg3[%c0_4, %c0_5] : memref<128x32xf32, #tpu.memory_space<vmem>>, vector<128x32xf32>
    %6 = arith.truncf %5 : vector<128x32xf32> to vector<128x32xbf16>
    %cst = arith.constant dense<0.000000e+00> : vector<128x32xf32>
    %7 = tpu.matmul %4, %6, %cst {dimension_numbers = #tpu.dot_dimension_numbers<[1], [0], [0], [1], [0, 0, 1, 1], [], []>} : vector<128x128xbf16>, vector<128x32xbf16>, vector<128x32xf32> -> vector<128x32xf32>
    %8 = arith.addf %3, %7 : vector<128x32xf32>
    %c0_6 = arith.constant 0 : index
    %c0_7 = arith.constant 0 : index
    %9 = vector.load %arg10[%c0_6, %c0_7] : memref<128x32xf32, #tpu.memory_space<vmem>>, vector<128x32xf32>
    tpu.vector_store %arg10[%c0_6, %c0_7], %8 {strides = array<i32>} : memref<128x32xf32, #tpu.memory_space<vmem>>, vector<128x32xf32>,
    %c1_i32 = arith.constant 1 : i32
    %10 = arith.cmpi eq, %arg1, %c1_i32 : i32
    %11 = arith.extui %10 : i1 to i32
    %c0_i32_8 = arith.constant 0 : i32
    %12 = arith.cmpi ne, %11, %c0_i32_8 : i32
    scf.if %12 {
      %c0_9 = arith.constant 0 : index
      %c0_10 = arith.constant 0 : index
      %13 = vector.load %arg10[%c0_9, %c0_10] : memref<128x32xf32, #tpu.memory_space<vmem>>, vector<128x32xf32>
      %c0_11 = arith.constant 0 : index
      %c0_12 = arith.constant 0 : index
      %14 = vector.load %arg5[%c0_11, %c0_12] : memref<128x1xf32, #tpu.memory_space<vmem>>, vector<128x1xf32>
      %15 = vector.broadcast %14 : vector<128x1xf32> to vector<128x32xf32>
      %16 = arith.mulf %13, %15 : vector<128x32xf32>
      %17 = arith.truncf %16 : vector<128x32xf32> to vector<128x32xbf16>
      %c0_13 = arith.constant 0 : index
      %c0_14 = arith.constant 0 : index
      %18 = vector.load %arg6[%c0_13, %c0_14] : memref<32x128xbf16, #tpu.memory_space<vmem>>, vector<32x128xbf16>
      %cst_15 = arith.constant dense<0.000000e+00> : vector<128x128xf32>
      %19 = tpu.matmul %17, %18, %cst_15 {dimension_numbers = #tpu.dot_dimension_numbers<[1], [0], [0], [1], [0, 0, 1, 1], [], []>} : vector<128x32xbf16>, vector<32x128xbf16>, vector<128x128xf32> -> vector<128x128xf32>
      %c0_16 = arith.constant 0 : index
      %c0_17 = arith.constant 0 : index
      %20 = vector.load %arg4[%c0_16, %c0_17] : memref<128x32xf32, #tpu.memory_space<vmem>>, vector<128x32xf32>
      %21 = arith.truncf %20 : vector<128x32xf32> to vector<128x32xbf16>
      %c0_18 = arith.constant 0 : index
      %c0_19 = arith.constant 0 : index
      %22 = vector.load %arg7[%c0_18, %c0_19] : memref<32x128xbf16, #tpu.memory_space<vmem>>, vector<32x128xbf16>
      %cst_20 = arith.constant dense<0.000000e+00> : vector<128x128xf32>
      %23 = tpu.matmul %21, %22, %cst_20 {dimension_numbers = #tpu.dot_dimension_numbers<[1], [0], [0], [1], [0, 0, 1, 1], [], []>} : vector<128x32xbf16>, vector<32x128xbf16>, vector<128x128xf32> -> vector<128x128xf32>
      %24 = arith.addf %19, %23 : vector<128x128xf32>
      %c0_21 = arith.constant 0 : index
      %c0_22 = arith.constant 0 : index
      %25 = vector.load %arg8[%c0_21, %c0_22] : memref<1x128xf32, #tpu.memory_space<vmem>>, vector<1x128xf32>
      %26 = vector.broadcast %25 : vector<1x128xf32> to vector<128x128xf32>
      %27 = arith.addf %24, %26 : vector<128x128xf32>
      %cst_23 = arith.constant 0.000000e+00 : f32
      %28 = vector.broadcast %cst_23 : f32 to vector<128x128xf32>
      %29 = arith.maximumf %27, %28 : vector<128x128xf32>
      %c0_24 = arith.constant 0 : index
      %c0_25 = arith.constant 0 : index
      %30 = vector.load %arg9[%c0_24, %c0_25] : memref<128x128xf32, #tpu.memory_space<vmem>>, vector<128x128xf32>
      tpu.vector_store %arg9[%c0_24, %c0_25], %29 {strides = array<i32>} : memref<128x128xf32, #tpu.memory_space<vmem>>, vector<128x128xf32>,
    } else {
    }
    return
  }
  func.func @transform_0(%arg0: i32, %arg1: i32) -> (i32, i32) {
    %c0_i32 = arith.constant 0 : i32
    return %arg0, %arg1 : i32, i32
  }
  func.func @transform_1(%arg0: i32, %arg1: i32) -> (i32, i32) {
    %c0_i32 = arith.constant 0 : i32
    %c0_i32_0 = arith.constant 0 : i32
    return %arg1, %c0_i32 : i32, i32
  }
  func.func @transform_2(%arg0: i32, %arg1: i32) -> (i32, i32) {
    %c0_i32 = arith.constant 0 : i32
    %c0_i32_0 = arith.constant 0 : i32
    return %arg0, %c0_i32 : i32, i32
  }
  func.func @transform_3(%arg0: i32, %arg1: i32) -> (i32, i32) {
    %c0_i32 = arith.constant 0 : i32
    %c0_i32_0 = arith.constant 0 : i32
    return %arg0, %c0_i32 : i32, i32
  }
  func.func @transform_4(%arg0: i32, %arg1: i32) -> (i32, i32) {
    %c0_i32 = arith.constant 0 : i32
    %c0_i32_0 = arith.constant 0 : i32
    %c0_i32_1 = arith.constant 0 : i32
    return %c0_i32, %c0_i32_0 : i32, i32
  }
  func.func @transform_5(%arg0: i32, %arg1: i32) -> (i32, i32) {
    %c0_i32 = arith.constant 0 : i32
    %c0_i32_0 = arith.constant 0 : i32
    %c0_i32_1 = arith.constant 0 : i32
    return %c0_i32, %c0_i32_0 : i32, i32
  }
  func.func @transform_6(%arg0: i32, %arg1: i32) -> (i32, i32) {
    %c0_i32 = arith.constant 0 : i32
    %c0_i32_0 = arith.constant 0 : i32
    %c0_i32_1 = arith.constant 0 : i32
    return %c0_i32, %c0_i32_0 : i32, i32
  }
  func.func @transform_7(%arg0: i32, %arg1: i32) -> (i32, i32) {
    %c0_i32 = arith.constant 0 : i32
    %c0_i32_0 = arith.constant 0 : i32
    return %arg0, %c0_i32 : i32, i32
  }
}

</mosaic_0001>

<llo_original>
// kernel: tpu_custom_call.1
$region0: #{tpu_custom_call.1}
  #allocation0 [shape = 'u32[]', space=smem, size = 0x4, offset = 0x4, fixed_abs, tag = 'smem constant byte address 0x4 - core index']
  #allocation1 [shape = 'u32[144,128]{1,0:T(1,128)}', space=vmem, size = 0x12000, scoped, tag = 'internal scratch']
  #allocation2 [shape = 'f32[128,32]{1,0:T(8,128)}', space=vmem, size = 0x10000, scoped, tag = 'scratch operand']
  %s0 = inlined_call_operand.vmem [shape: bf16[256,256], index: 0, kind: input, shape index: {}]
  %s1 = inlined_call_operand.vmem [shape: f32[256,32], index: 1, kind: input, shape index: {}]
  %s2 = inlined_call_operand.vmem [shape: f32[256,32], index: 2, kind: input, shape index: {}]
  %s3 = inlined_call_operand.vmem [shape: f32[256,1], index: 3, kind: input, shape index: {}]
  %s4 = inlined_call_operand.vmem [shape: bf16[32,128], index: 4, kind: input, shape index: {}]
  %s5 = inlined_call_operand.vmem [shape: bf16[32,128], index: 5, kind: input, shape index: {}]
  %s6 = inlined_call_operand.vmem [shape: f32[1,128], index: 6, kind: input, shape index: {}]
  %s7 = inlined_call_operand.hbm [shape: f32[256,128], index: 7, kind: output, shape index: {}]
  %s8 = sld [smem:[#allocation0]]
  $region110: #{tpu_custom_call.1} parent=0
    _
  %s10 = ssub.s32 1, %s8
  %s11 = scalar_select 0, %s10, %s8
  $region1: #{tpu_custom_call.1} parent=0
    #allocation3 [shape = 'u8[65536]{0}', space=vmem, size = 0x10000, scoped, tag = 'input window, operand 0']
    #allocation4 [shape = 'u8[131072]{0}', space=vmem, size = 0x20000, scoped, tag = 'output window, operand 0']
    #allocation5 [shape = 's32[2]{0}', space=sflag, size = 0x8, scoped, tag = 'scoped memory for tpu_custom_call.1']
    %12 = vsyncpa [#allocation5], 0
    %s13 = scalar_lea.sflag [#allocation5], 1
    %14 = vsyncpa %s13, 0
    loop: start=0, step=1, limit=6
    $region2: #{tpu_custom_call.1} parent=1 // loop_pre_header
      _
    $region3: #{tpu_custom_call.1} parent=1 // loop_header
      %s16 = sphi 0, %s20
      %p17 = scmp.ge.s32.totalorder %s16, 6
      %s23 = sphi 0, %s35
      %s24 = sphi 0, %s31
      %s25 = sphi 0, %s23
      %s26 = sphi 0, %s24
      %s27 = sphi 0, %s25
      %s28 = sphi 0, %s26
      %s40 = sphi 0, %s42
      %s43 = sphi 0, %s40
      %s44 = sphi 0, %s43
      %s60 = sphi 0, %s44
      %s66 = sphi 0, %s68
      %s69 = sphi 0, %s66
      %s70 = sphi 0, %s69
      %s86 = sphi 0, %s70
      %s92 = sphi 0, %s94
      %s95 = sphi 0, %s92
      %s96 = sphi 0, %s95
      %s112 = sphi 0, %s96
      %s118 = sphi 0, %s120
      %s121 = sphi 0, %s118
      %s122 = sphi 0, %s121
      %s138 = sphi 0, %s122
      %s142 = sphi 0, %s142
      %s144 = sphi 0, %s142
      %s145 = sphi 0, %s144
      %s159 = sphi 0, %s145
      %s163 = sphi 0, %s163
      %s165 = sphi 0, %s163
      %s166 = sphi 0, %s165
      %s180 = sphi 0, %s166
      %s184 = sphi 0, %s184
      %s186 = sphi 0, %s184
      %s187 = sphi 0, %s186
      %s201 = sphi 0, %s187
      %s207 = sphi 0, %s209
      %s210 = sphi 0, %s207
      %s211 = sphi 0, %s210
      %s227 = sphi 0, %s211
    $region4: #{tpu_custom_call.1} parent=1 // loop_header_branch
      %19 = sbr.rel (%p17) target = $region8
    $region5: #{tpu_custom_call.1} parent=1 // loop_body
      %s21 = ssub.s32 %s16, 1
      %s22 = ssub.s32 %s16, 2
      %s29 = sadd.s32 1, %s24
      %p30 = scmp.ge.s32.totalorder %s29, 2
      %s31 = scalar_select %p30, 0, %s29
      %s32 = sadd.s32 1, %s23
      %s33 = scalar_select %p30, %s32, %s23
      %p34 = scmp.ge.s32.totalorder %s33, 2
      %s35 = scalar_select %p34, 0, %s33
      %s36 = ssub.s32 %s23, %s35
      %s37 = ssub.s32 %s24, %s31
      %s38 = sor.u32 %s36, %s37
      %p39 = scmp.eq.s32.totalorder %s38, 0
      %s41 = sadd.s32 %s40, 1
      %s42 = scalar_select %p39, %s40, %s41
      %p45 = pneg %p39
      %p46 = scmp.eq.s32.totalorder %s16, 3
      %p47 = por %p45, %p46
      %p48 = scmp.ne.s32.totalorder %s40, %s43
      %p49 = scmp.eq.s32.totalorder %s16, 0
      %p50 = por %p48, %p49
      %p51 = scmp.ne.s32.totalorder %s40, %s43
      %p52 = scmp.eq.s32.totalorder %s21, 3
      %p53 = por %p51, %p52
      %p54 = scmp.ne.s32.totalorder %s43, %s44
      %p55 = scmp.eq.s32.totalorder %s21, 0
      %p56 = por %p54, %p55
      %p57 = scmp.ne.s32.totalorder %s43, %s44
      %p58 = scmp.eq.s32.totalorder %s22, 3
      %p59 = por %p57, %p58
      %p61 = scmp.ne.s32.totalorder %s44, %s60
      %p62 = scmp.eq.s32.totalorder %s22, 0
      %p63 = por %p61, %p62
      %s64 = ssub.s32 %s24, %s31
      %p65 = scmp.eq.s32.totalorder %s64, 0
      %s67 = sadd.s32 %s66, 1
      %s68 = scalar_select %p65, %s66, %s67
      %p71 = pneg %p65
      %p72 = scmp.eq.s32.totalorder %s16, 3
      %p73 = por %p71, %p72
      %p74 = scmp.ne.s32.totalorder %s66, %s69
      %p75 = scmp.eq.s32.totalorder %s16, 0
      %p76 = por %p74, %p75
      %p77 = scmp.ne.s32.totalorder %s66, %s69
      %p78 = scmp.eq.s32.totalorder %s21, 3
      %p79 = por %p77, %p78
      %p80 = scmp.ne.s32.totalorder %s69, %s70
      %p81 = scmp.eq.s32.totalorder %s21, 0
      %p82 = por %p80, %p81
      %p83 = scmp.ne.s32.totalorder %s69, %s70
      %p84 = scmp.eq.s32.totalorder %s22, 3
      %p85 = por %p83, %p84
      %p87 = scmp.ne.s32.totalorder %s70, %s86
      %p88 = scmp.eq.s32.totalorder %s22, 0
      %p89 = por %p87, %p88
      %s90 = ssub.s32 %s23, %s35
      %p91 = scmp.eq.s32.totalorder %s90, 0
      %s93 = sadd.s32 %s92, 1
      %s94 = scalar_select %p91, %s92, %s93
      %p97 = pneg %p91
      %p98 = scmp.eq.s32.totalorder %s16, 3
      %p99 = por %p97, %p98
      %p100 = scmp.ne.s32.totalorder %s92, %s95
      %p101 = scmp.eq.s32.totalorder %s16, 0
      %p102 = por %p100, %p101
      %p103 = scmp.ne.s32.totalorder %s92, %s95
      %p104 = scmp.eq.s32.totalorder %s21, 3
      %p105 = por %p103, %p104
      %p106 = scmp.ne.s32.totalorder %s95, %s96
      %p107 = scmp.eq.s32.totalorder %s21, 0
      %p108 = por %p106, %p107
      %p109 = scmp.ne.s32.totalorder %s95, %s96
      %p110 = scmp.eq.s32.totalorder %s22, 3
      %p111 = por %p109, %p110
      %p113 = scmp.ne.s32.totalorder %s96, %s112
      %p114 = scmp.eq.s32.totalorder %s22, 0
      %p115 = por %p113, %p114
      %s116 = ssub.s32 %s23, %s35
      %p117 = scmp.eq.s32.totalorder %s116, 0
      %s119 = sadd.s32 %s118, 1
      %s120 = scalar_select %p117, %s118, %s119
      %p123 = pneg %p117
      %p124 = scmp.eq.s32.totalorder %s16, 3
      %p125 = por %p123, %p124
      %p126 = scmp.ne.s32.totalorder %s118, %s121
      %p127 = scmp.eq.s32.totalorder %s16, 0
      %p128 = por %p126, %p127
      %p129 = scmp.ne.s32.totalorder %s118, %s121
      %p130 = scmp.eq.s32.totalorder %s21, 3
      %p131 = por %p129, %p130
      %p132 = scmp.ne.s32.totalorder %s121, %s122
      %p133 = scmp.eq.s32.totalorder %s21, 0
      %p134 = por %p132, %p133
      %p135 = scmp.ne.s32.totalorder %s121, %s122
      %p136 = scmp.eq.s32.totalorder %s22, 3
      %p137 = por %p135, %p136
      %p139 = scmp.ne.s32.totalorder %s122, %s138
      %p140 = scmp.eq.s32.totalorder %s22, 0
      %p141 = por %p139, %p140
      %s143 = sadd.s32 %s142, 1
      %p146 = scmp.eq.s32.totalorder %s16, 3
      %p147 = scmp.ne.s32.totalorder %s142, %s144
      %p148 = scmp.eq.s32.totalorder %s16, 0
      %p149 = por %p147, %p148
      %p150 = scmp.ne.s32.totalorder %s142, %s144
      %p151 = scmp.eq.s32.totalorder %s21, 3
      %p152 = por %p150, %p151
      %p153 = scmp.ne.s32.totalorder %s144, %s145
      %p154 = scmp.eq.s32.totalorder %s21, 0
      %p155 = por %p153, %p154
      %p156 = scmp.ne.s32.totalorder %s144, %s145
      %p157 = scmp.eq.s32.totalorder %s22, 3
      %p158 = por %p156, %p157
      %p160 = scmp.ne.s32.totalorder %s145, %s159
      %p161 = scmp.eq.s32.totalorder %s22, 0
      %p162 = por %p160, %p161
      %s164 = sadd.s32 %s163, 1
      %p167 = scmp.eq.s32.totalorder %s16, 3
      %p168 = scmp.ne.s32.totalorder %s163, %s165
      %p169 = scmp.eq.s32.totalorder %s16, 0
      %p170 = por %p168, %p169
      %p171 = scmp.ne.s32.totalorder %s163, %s165
      %p172 = scmp.eq.s32.totalorder %s21, 3
      %p173 = por %p171, %p172
      %p174 = scmp.ne.s32.totalorder %s165, %s166
      %p175 = scmp.eq.s32.totalorder %s21, 0
      %p176 = por %p174, %p175
      %p177 = scmp.ne.s32.totalorder %s165, %s166
      %p178 = scmp.eq.s32.totalorder %s22, 3
      %p179 = por %p177, %p178
      %p181 = scmp.ne.s32.totalorder %s166, %s180
      %p182 = scmp.eq.s32.totalorder %s22, 0
      %p183 = por %p181, %p182
      %s185 = sadd.s32 %s184, 1
      %p188 = scmp.eq.s32.totalorder %s16, 3
      %p189 = scmp.ne.s32.totalorder %s184, %s186
      %p190 = scmp.eq.s32.totalorder %s16, 0
      %p191 = por %p189, %p190
      %p192 = scmp.ne.s32.totalorder %s184, %s186
      %p193 = scmp.eq.s32.totalorder %s21, 3
      %p194 = por %p192, %p193
      %p195 = scmp.ne.s32.totalorder %s186, %s187
      %p196 = scmp.eq.s32.totalorder %s21, 0
      %p197 = por %p195, %p196
      %p198 = scmp.ne.s32.totalorder %s186, %s187
      %p199 = scmp.eq.s32.totalorder %s22, 3
      %p200 = por %p198, %p199
      %p202 = scmp.ne.s32.totalorder %s187, %s201
      %p203 = scmp.eq.s32.totalorder %s22, 0
      %p204 = por %p202, %p203
      %s205 = ssub.s32 %s23, %s35
      %p206 = scmp.eq.s32.totalorder %s205, 0
      %s208 = sadd.s32 %s207, 1
      %s209 = scalar_select %p206, %s207, %s208
      %p212 = pneg %p206
      %p213 = scmp.eq.s32.totalorder %s16, 3
      %p214 = por %p212, %p213
      %p215 = scmp.ne.s32.totalorder %s207, %s210
      %p216 = scmp.eq.s32.totalorder %s16, 0
      %p217 = por %p215, %p216
      %p218 = scmp.ne.s32.totalorder %s207, %s210
      %p219 = scmp.eq.s32.totalorder %s21, 3
      %p220 = por %p218, %p219
      %p221 = scmp.ne.s32.totalorder %s210, %s211
      %p222 = scmp.eq.s32.totalorder %s21, 0
      %p223 = por %p221, %p222
      %p224 = scmp.ne.s32.totalorder %s210, %s211
      %p225 = scmp.eq.s32.totalorder %s22, 3
      %p226 = por %p224, %p225
      %p228 = scmp.ne.s32.totalorder %s211, %s227
      %p229 = scmp.eq.s32.totalorder %s22, 0
      %p230 = por %p228, %p229
      %p231 = scmp.le.s32.totalorder 1, %s16
      %p232 = scmp.lt.s32.totalorder %s16, 5
      %p233 = pnand %p231, %p232
      %p234 = pneg %p233
      // Predicated region
      $region9: #{tpu_custom_call.1} parent=5 // pred_check
        _
      $region10: #{tpu_custom_call.1} parent=5 // pred_check_branch
        %236 = sbr.rel (%p233) target = $region12
      $region11: #{tpu_custom_call.1} parent=5 // pred_region
        %s237 = ssub.s32 %s16, 1
        // Predicated region
        $region13: #{tpu_custom_call.1} parent=11 // pred_check
          %p238 = pneg %p155
        $region14: #{tpu_custom_call.1} parent=11 // pred_check_branch
          %240 = sbr.rel (%p238) target = $region16
        $region15: #{tpu_custom_call.1} parent=11 // pred_region
          _
        $region16: #{tpu_custom_call.1} parent=11 // pred_fallthru
          _
        // Predicated region
        $region17: #{tpu_custom_call.1} parent=11 // pred_check
          %p241 = pneg %p176
        $region18: #{tpu_custom_call.1} parent=11 // pred_check_branch
          %243 = sbr.rel (%p241) target = $region20
        $region19: #{tpu_custom_call.1} parent=11 // pred_region
          _
        $region20: #{tpu_custom_call.1} parent=11 // pred_fallthru
          _
        // Predicated region
        $region21: #{tpu_custom_call.1} parent=11 // pred_check
          %p244 = pneg %p197
        $region22: #{tpu_custom_call.1} parent=11 // pred_check_branch
          %246 = sbr.rel (%p244) target = $region24
        $region23: #{tpu_custom_call.1} parent=11 // pred_region
          _
        $region24: #{tpu_custom_call.1} parent=11 // pred_fallthru
          _
      $region12: #{tpu_custom_call.1} parent=5 // pred_fallthru
        _
      %p247 = scmp.lt.s32.totalorder %s16, 4
      // Predicated region
      $region25: #{tpu_custom_call.1} parent=5 // pred_check
        %p248 = pneg %p247
      $region26: #{tpu_custom_call.1} parent=5 // pred_check_branch
        %250 = sbr.rel (%p248) target = $region28
      $region27: #{tpu_custom_call.1} parent=5 // pred_region
        // Predicated region
        $region29: #{tpu_custom_call.1} parent=27 // pred_check
          %p251 = pneg %p50
        $region30: #{tpu_custom_call.1} parent=27 // pred_check_branch
          %253 = sbr.rel (%p251) target = $region32
        $region31: #{tpu_custom_call.1} parent=27 // pred_region
          %s254 = sand.u32 %s40, 1
          %s255 = sand.u32 %s40, 1
          %s256 = smul.addr %s255, 64
          %s257 = scalar_lea.vmem [#allocation3], %s256
          %s258 = smul.u32 16, %s23
          %s259 = smul.addr %s258, 2
          %s260 = sadd.s32 %s24, %s259
          %s261 = smul.addr %s260, 4
          %s262 = scalar_lea.vmem %s0, %s261
          // Predicated region
          $region33: #{tpu_custom_call.1} parent=31 // pred_check
            _
          $region34: #{tpu_custom_call.1} parent=31 // pred_check_branch
            %264 = sbr.rel (0) target = $region36
          $region35: #{tpu_custom_call.1} parent=31 // pred_region
            // Predicated region
            $region37: #{tpu_custom_call.1} parent=35 // pred_check
              _
            $region38: #{tpu_custom_call.1} parent=35 // pred_check_branch
              %266 = sbr.rel target = $region40
            $region39: #{tpu_custom_call.1} parent=35 // pred_region
              // Predicated region
              $region52: #{tpu_custom_call.1} parent=39 // pred_check
                _
              $region53: #{tpu_custom_call.1} parent=39 // pred_check_branch
                %312 = sbr.rel (0) target = $region55
              $region54: #{tpu_custom_call.1} parent=39 // pred_region
                loop: start=0, step=1, limit=1
                $region56: #{tpu_custom_call.1} parent=54 // loop_pre_header
                  _
                $region57: #{tpu_custom_call.1} parent=54 // loop_header
                  %s314 = sphi 0, %s318
                  %p315 = scmp.ge.s32.totalorder %s314, 1
                  %s319 = sphi %s262, %s262
                  %s320 = sphi %s257, %s257
                $region58: #{tpu_custom_call.1} parent=54 // loop_header_branch
                  %317 = sbr.rel (%p315) target = $region62
                $region59: #{tpu_custom_call.1} parent=54 // loop_body
                  _
                $region60: #{tpu_custom_call.1} parent=54 // loop_footer
                  %s318 = sadd.s32 1, %s314
                $region61: #{tpu_custom_call.1} parent=54 // loop_footer_branch
                  %313 = sbr.rel target = $region57
                $region62: #{tpu_custom_call.1} parent=54 // loop_exit
                  _
                %s322 = ssub.s32 16, 1
                loop: start=0, step=1, limit=1
                $region63: #{tpu_custom_call.1} parent=54 // loop_pre_header
                  _
                $region64: #{tpu_custom_call.1} parent=54 // loop_header
                  %s324 = sphi 0, %s328
                  %p325 = scmp.ge.s32.totalorder %s324, 1
                  %s329 = sphi %s262, %s262
                  %s330 = sphi %s257, %s257
                $region65: #{tpu_custom_call.1} parent=54 // loop_header_branch
                  %327 = sbr.rel (%p325) target = $region69
                $region66: #{tpu_custom_call.1} parent=54 // loop_body
                  %v331 = vld [vmem:[%s329] sm:%s322]
                  %332 = vst [vmem:[%s330] sm:%s322] %v331
                  %v333 = vld [vmem:[%s329 + $0x8] sm:%s322]
                  %334 = vst [vmem:[%s330 + $0x4] sm:%s322] %v333
                  %v335 = vld [vmem:[%s329 + $0x10] sm:%s322]
                  %336 = vst [vmem:[%s330 + $0x8] sm:%s322] %v335
                  %v337 = vld [vmem:[%s329 + $0x18] sm:%s322]
                  %338 = vst [vmem:[%s330 + $0xc] sm:%s322] %v337
                  %v339 = vld [vmem:[%s329 + $0x20] sm:%s322]
                  %340 = vst [vmem:[%s330 + $0x10] sm:%s322] %v339
                  %v341 = vld [vmem:[%s329 + $0x28] sm:%s322]
                  %342 = vst [vmem:[%s330 + $0x14] sm:%s322] %v341
                  %v343 = vld [vmem:[%s329 + $0x30] sm:%s322]
                  %344 = vst [vmem:[%s330 + $0x18] sm:%s322] %v343
                  %v345 = vld [vmem:[%s329 + $0x38] sm:%s322]
                  %346 = vst [vmem:[%s330 + $0x1c] sm:%s322] %v345
                  %v347 = vld [vmem:[%s329 + $0x40] sm:%s322]
                  %348 = vst [vmem:[%s330 + $0x20] sm:%s322] %v347
                  %v349 = vld [vmem:[%s329 + $0x48] sm:%s322]
                  %350 = vst [vmem:[%s330 + $0x24] sm:%s322] %v349
                  %v351 = vld [vmem:[%s329 + $0x50] sm:%s322]
                  %352 = vst [vmem:[%s330 + $0x28] sm:%s322] %v351
                  %v353 = vld [vmem:[%s329 + $0x58] sm:%s322]
                  %354 = vst [vmem:[%s330 + $0x2c] sm:%s322] %v353
                  %v355 = vld [vmem:[%s329 + $0x60] sm:%s322]
                  %356 = vst [vmem:[%s330 + $0x30] sm:%s322] %v355
                  %v357 = vld [vmem:[%s329 + $0x68] sm:%s322]
                  %358 = vst [vmem:[%s330 + $0x34] sm:%s322] %v357
                  %v359 = vld [vmem:[%s329 + $0x70] sm:%s322]
                  %360 = vst [vmem:[%s330 + $0x38] sm:%s322] %v359
                  %v361 = vld [vmem:[%s329 + $0x78] sm:%s322]
                  %362 = vst [vmem:[%s330 + $0x3c] sm:%s322] %v361
                $region67: #{tpu_custom_call.1} parent=54 // loop_footer
                  %s328 = sadd.s32 1, %s324
                $region68: #{tpu_custom_call.1} parent=54 // loop_footer_branch
                  %323 = sbr.rel target = $region64
                $region69: #{tpu_custom_call.1} parent=54 // loop_exit
                  _
              $region55: #{tpu_custom_call.1} parent=39 // pred_fallthru
                _
            $region40: #{tpu_custom_call.1} parent=35 // pred_fallthru
              _
            // Predicated region
            $region41: #{tpu_custom_call.1} parent=35 // pred_check
              _
            $region42: #{tpu_custom_call.1} parent=35 // pred_check_branch
              %268 = sbr.rel (0) target = $region44
            $region43: #{tpu_custom_call.1} parent=35 // pred_region
              %s270 = ssub.s32 16, 1
              loop: start=0, step=1, limit=1
              $region45: #{tpu_custom_call.1} parent=43 // loop_pre_header
                _
              $region46: #{tpu_custom_call.1} parent=43 // loop_header
                %s272 = sphi 0, %s276
                %p273 = scmp.ge.s32.totalorder %s272, 1
                %s277 = sphi %s262, %s262
                %s278 = sphi %s257, %s257
              $region47: #{tpu_custom_call.1} parent=43 // loop_header_branch
                %275 = sbr.rel (%p273) target = $region51
              $region48: #{tpu_custom_call.1} parent=43 // loop_body
                %v279 = vld [vmem:[%s277] sm:%s270]
                %280 = vst [vmem:[%s278] sm:%s270] %v279
                %v281 = vld [vmem:[%s277 + $0x8] sm:%s270]
                %282 = vst [vmem:[%s278 + $0x4] sm:%s270] %v281
                %v283 = vld [vmem:[%s277 + $0x10] sm:%s270]
                %284 = vst [vmem:[%s278 + $0x8] sm:%s270] %v283
                %v285 = vld [vmem:[%s277 + $0x18] sm:%s270]
                %286 = vst [vmem:[%s278 + $0xc] sm:%s270] %v285
                %v287 = vld [vmem:[%s277 + $0x20] sm:%s270]
                %288 = vst [vmem:[%s278 + $0x10] sm:%s270] %v287
                %v289 = vld [vmem:[%s277 + $0x28] sm:%s270]
                %290 = vst [vmem:[%s278 + $0x14] sm:%s270] %v289
                %v291 = vld [vmem:[%s277 + $0x30] sm:%s270]
                %292 = vst [vmem:[%s278 + $0x18] sm:%s270] %v291
                %v293 = vld [vmem:[%s277 + $0x38] sm:%s270]
                %294 = vst [vmem:[%s278 + $0x1c] sm:%s270] %v293
                %v295 = vld [vmem:[%s277 + $0x40] sm:%s270]
                %296 = vst [vmem:[%s278 + $0x20] sm:%s270] %v295
                %v297 = vld [vmem:[%s277 + $0x48] sm:%s270]
                %298 = vst [vmem:[%s278 + $0x24] sm:%s270] %v297
                %v299 = vld [vmem:[%s277 + $0x50] sm:%s270]
                %300 = vst [vmem:[%s278 + $0x28] sm:%s270] %v299
                %v301 = vld [vmem:[%s277 + $0x58] sm:%s270]
                %302 = vst [vmem:[%s278 + $0x2c] sm:%s270] %v301
                %v303 = vld [vmem:[%s277 + $0x60] sm:%s270]
                %304 = vst [vmem:[%s278 + $0x30] sm:%s270] %v303
                %v305 = vld [vmem:[%s277 + $0x68] sm:%s270]
                %306 = vst [vmem:[%s278 + $0x34] sm:%s270] %v305
                %v307 = vld [vmem:[%s277 + $0x70] sm:%s270]
                %308 = vst [vmem:[%s278 + $0x38] sm:%s270] %v307
                %v309 = vld [vmem:[%s277 + $0x78] sm:%s270]
                %310 = vst [vmem:[%s278 + $0x3c] sm:%s270] %v309
              $region49: #{tpu_custom_call.1} parent=43 // loop_footer
                %s276 = sadd.s32 1, %s272
              $region50: #{tpu_custom_call.1} parent=43 // loop_footer_branch
                %271 = sbr.rel target = $region46
              $region51: #{tpu_custom_call.1} parent=43 // loop_exit
                _
            $region44: #{tpu_custom_call.1} parent=35 // pred_fallthru
              _
          $region36: #{tpu_custom_call.1} parent=31 // pred_fallthru
            _
          %363 = vnop
        $region32: #{tpu_custom_call.1} parent=27 // pred_fallthru
          _
        // Predicated region
        $region70: #{tpu_custom_call.1} parent=27 // pred_check
          %p364 = pneg %p76
        $region71: #{tpu_custom_call.1} parent=27 // pred_check_branch
          %366 = sbr.rel (%p364) target = $region73
        $region72: #{tpu_custom_call.1} parent=27 // pred_region
          %s367 = smul.u32 16, %s24
          %p368 = scmp.lt.s32.totalorder %s367, 31
          %s369 = scalar_select %p368, %s367, 31
          %s370 = smul.addr %s369, 8
          %s371 = scalar_lea.vmem %s1, %s370
          %s372 = smul.u32 16, %s24
        $region73: #{tpu_custom_call.1} parent=27 // pred_fallthru
          _
        // Predicated region
        $region74: #{tpu_custom_call.1} parent=27 // pred_check
          %p373 = pneg %p102
        $region75: #{tpu_custom_call.1} parent=27 // pred_check_branch
          %375 = sbr.rel (%p373) target = $region77
        $region76: #{tpu_custom_call.1} parent=27 // pred_region
          %s376 = smul.u32 16, %s23
          %p377 = scmp.lt.s32.totalorder %s376, 31
          %s378 = scalar_select %p377, %s376, 31
          %s379 = smul.addr %s378, 8
          %s380 = scalar_lea.vmem %s2, %s379
          %s381 = smul.u32 16, %s23
        $region77: #{tpu_custom_call.1} parent=27 // pred_fallthru
          _
        // Predicated region
        $region78: #{tpu_custom_call.1} parent=27 // pred_check
          %p382 = pneg %p128
        $region79: #{tpu_custom_call.1} parent=27 // pred_check_branch
          %384 = sbr.rel (%p382) target = $region81
        $region80: #{tpu_custom_call.1} parent=27 // pred_region
          %s385 = smul.u32 16, %s23
          %p386 = scmp.lt.s32.totalorder %s385, 31
          %s387 = scalar_select %p386, %s385, 31
          %s388 = smul.addr %s387, 8
          %s389 = scalar_lea.vmem %s3, %s388
          %s390 = smul.u32 16, %s23
        $region81: #{tpu_custom_call.1} parent=27 // pred_fallthru
          _
      $region28: #{tpu_custom_call.1} parent=5 // pred_fallthru
        _
      %p391 = scmp.le.s32.totalorder 1, %s16
      %p392 = scmp.lt.s32.totalorder %s16, 5
      %p393 = pnand %p391, %p392
      %p394 = pneg %p393
      // Predicated region
      $region82: #{tpu_custom_call.1} parent=5 // pred_check
        _
      $region83: #{tpu_custom_call.1} parent=5 // pred_check_branch
        %396 = sbr.rel (%p393) target = $region85
      $region84: #{tpu_custom_call.1} parent=5 // pred_region
        %s397 = ssub.s32 %s16, 1
        %s398 = sand.u32 %s43, 1
        %s399 = sand.u32 %s43, 1
        %s400 = smul.addr %s399, 64
        %s401 = scalar_lea.vmem [#allocation3], %s400
        // Predicated region
        $region86: #{tpu_custom_call.1} parent=84 // pred_check
          %p402 = pneg %p56
        $region87: #{tpu_custom_call.1} parent=84 // pred_check_branch
          %404 = sbr.rel (%p402) target = $region89
        $region88: #{tpu_custom_call.1} parent=84 // pred_region
          _
        $region89: #{tpu_custom_call.1} parent=84 // pred_fallthru
          _
        %s405 = sand.u32 %s43, 1
        %s406 = sand.u32 %s43, 1
        %s407 = smul.addr %s406, 64
        %s408 = scalar_lea.vmem [#allocation3], %s407
        %p409 = pneg %p56
        %p410 = pneg %p53
        %s411 = smul.u32 16, %s26
        %p412 = scmp.lt.s32.totalorder %s411, 31
        %s413 = scalar_select %p412, %s411, 31
        %s414 = smul.addr %s413, 8
        %s415 = scalar_lea.vmem %s1, %s414
        %p416 = pneg %p82
        %p417 = pneg %p79
        %s418 = smul.u32 16, %s25
        %p419 = scmp.lt.s32.totalorder %s418, 31
        %s420 = scalar_select %p419, %s418, 31
        %s421 = smul.addr %s420, 8
        %s422 = scalar_lea.vmem %s2, %s421
        %p423 = pneg %p108
        %p424 = pneg %p105
        %s425 = smul.u32 16, %s25
        %p426 = scmp.lt.s32.totalorder %s425, 31
        %s427 = scalar_select %p426, %s425, 31
        %s428 = smul.addr %s427, 8
        %s429 = scalar_lea.vmem %s3, %s428
        %p430 = pneg %p134
        %p431 = pneg %p131
        %p432 = pneg %p155
        %p433 = pneg %p152
        %p434 = pneg %p176
        %p435 = pneg %p173
        %p436 = pneg %p197
        %p437 = pneg %p194
        %p438 = pneg %p223
        %p439 = pneg %p220
        %s440 = sand.u32 %s210, 1
        %s441 = scalar_lea.sflag [#allocation5], %s440
        %s442 = sand.u32 %s210, 1
        %s443 = smul.addr %s442, 128
        %s444 = scalar_lea.vmem [#allocation4], %s443
        %s445 = smul.u32 16, %s25
        %s446 = smul.u32 16, %s26
        %p447 = scmp.lt.s32.totalorder %s446, 31
        %s448 = scalar_select %p447, %s446, 31
        %s449 = smul.addr %s448, 8
        %s450 = scalar_lea.vmem %s1, %s449
        %s451 = smul.u32 16, %s26
        %s452 = smul.u32 16, %s25
        %p453 = scmp.lt.s32.totalorder %s452, 31
        %s454 = scalar_select %p453, %s452, 31
        %s455 = smul.addr %s454, 8
        %s456 = scalar_lea.vmem %s2, %s455
        %s457 = smul.u32 16, %s25
        %s458 = smul.u32 16, %s25
        %p459 = scmp.lt.s32.totalorder %s458, 31
        %s460 = scalar_select %p459, %s458, 31
        %s461 = smul.addr %s460, 8
        %s462 = scalar_lea.vmem %s3, %s461
        %s463 = smul.u32 16, %s25
        %s464 = smul.u32 16, %s25
        %p466 = scmp.eq.s32.totalorder %s26, 0
        // Predicated region
        $region90: #{tpu_custom_call.1} parent=84 // pred_check
          %p467 = pneg %p466
        $region91: #{tpu_custom_call.1} parent=84 // pred_check_branch
          %469 = sbr.rel (%p467) target = $region93
        $region92: #{tpu_custom_call.1} parent=84 // pred_region
          %vm470 = vcmask 261120
          %471 = vst.msk [vmem:[#allocation2] sm:$0xff] %vm470, 0.0
          %472 = vst.msk [vmem:[#allocation2 + $0x8] sm:$0xff] %vm470, 0.0
          %473 = vst.msk [vmem:[#allocation2 + $0x10] sm:$0xff] %vm470, 0.0
          %474 = vst.msk [vmem:[#allocation2 + $0x18] sm:$0xff] %vm470, 0.0
          %475 = vst.msk [vmem:[#allocation2 + $0x20] sm:$0xff] %vm470, 0.0
          %476 = vst.msk [vmem:[#allocation2 + $0x28] sm:$0xff] %vm470, 0.0
          %477 = vst.msk [vmem:[#allocation2 + $0x30] sm:$0xff] %vm470, 0.0
          %478 = vst.msk [vmem:[#allocation2 + $0x38] sm:$0xff] %vm470, 0.0
          %479 = vst.msk [vmem:[#allocation2 + $0x40] sm:$0xff] %vm470, 0.0
          %480 = vst.msk [vmem:[#allocation2 + $0x48] sm:$0xff] %vm470, 0.0
          %481 = vst.msk [vmem:[#allocation2 + $0x50] sm:$0xff] %vm470, 0.0
          %482 = vst.msk [vmem:[#allocation2 + $0x58] sm:$0xff] %vm470, 0.0
          %483 = vst.msk [vmem:[#allocation2 + $0x60] sm:$0xff] %vm470, 0.0
          %484 = vst.msk [vmem:[#allocation2 + $0x68] sm:$0xff] %vm470, 0.0
          %485 = vst.msk [vmem:[#allocation2 + $0x70] sm:$0xff] %vm470, 0.0
          %486 = vst.msk [vmem:[#allocation2 + $0x78] sm:$0xff] %vm470, 0.0
        $region93: #{tpu_custom_call.1} parent=84 // pred_fallthru
          _
        %v487 = vld [vmem:[#allocation2] sm:$0xff]
        %v488 = vld [vmem:[#allocation2 + $0x8] sm:$0xff]
        %v489 = vld [vmem:[#allocation2 + $0x10] sm:$0xff]
        %v490 = vld [vmem:[#allocation2 + $0x18] sm:$0xff]
        %v491 = vld [vmem:[#allocation2 + $0x20] sm:$0xff]
        %v492 = vld [vmem:[#allocation2 + $0x28] sm:$0xff]
        %v493 = vld [vmem:[#allocation2 + $0x30] sm:$0xff]
        %v494 = vld [vmem:[#allocation2 + $0x38] sm:$0xff]
        %v495 = vld [vmem:[#allocation2 + $0x40] sm:$0xff]
        %v496 = vld [vmem:[#allocation2 + $0x48] sm:$0xff]
        %v497 = vld [vmem:[#allocation2 + $0x50] sm:$0xff]
        %v498 = vld [vmem:[#allocation2 + $0x58] sm:$0xff]
        %v499 = vld [vmem:[#allocation2 + $0x60] sm:$0xff]
        %v500 = vld [vmem:[#allocation2 + $0x68] sm:$0xff]
        %v501 = vld [vmem:[#allocation2 + $0x70] sm:$0xff]
        %v502 = vld [vmem:[#allocation2 + $0x78] sm:$0xff]
        %v503 = vld [vmem:[%s401] sm:$0xf]
        %v504 = vld [vmem:[%s401 + $0x4] sm:$0xf]
        %v505 = vld [vmem:[%s401 + $0x8] sm:$0xf]
        %v506 = vld [vmem:[%s401 + $0xc] sm:$0xf]
        %v507 = vld [vmem:[%s401 + $0x10] sm:$0xf]
        %v508 = vld [vmem:[%s401 + $0x14] sm:$0xf]
        %v509 = vld [vmem:[%s401 + $0x18] sm:$0xf]
        %v510 = vld [vmem:[%s401 + $0x1c] sm:$0xf]
        %v511 = vld [vmem:[%s401 + $0x20] sm:$0xf]
        %v512 = vld [vmem:[%s401 + $0x24] sm:$0xf]
        %v513 = vld [vmem:[%s401 + $0x28] sm:$0xf]
        %v514 = vld [vmem:[%s401 + $0x2c] sm:$0xf]
        %v515 = vld [vmem:[%s401 + $0x30] sm:$0xf]
        %v516 = vld [vmem:[%s401 + $0x34] sm:$0xf]
        %v517 = vld [vmem:[%s401 + $0x38] sm:$0xf]
        %v518 = vld [vmem:[%s401 + $0x3c] sm:$0xf]
        %v519 = vld [vmem:[%s450] sm:$0xff]
        %v520 = vld [vmem:[%s450 + $0x8] sm:$0xff]
        %v521 = vld [vmem:[%s450 + $0x10] sm:$0xff]
        %v522 = vld [vmem:[%s450 + $0x18] sm:$0xff]
        %v523 = vld [vmem:[%s450 + $0x20] sm:$0xff]
        %v524 = vld [vmem:[%s450 + $0x28] sm:$0xff]
        %v525 = vld [vmem:[%s450 + $0x30] sm:$0xff]
        %v526 = vld [vmem:[%s450 + $0x38] sm:$0xff]
        %v527 = vld [vmem:[%s450 + $0x40] sm:$0xff]
        %v528 = vld [vmem:[%s450 + $0x48] sm:$0xff]
        %v529 = vld [vmem:[%s450 + $0x50] sm:$0xff]
        %v530 = vld [vmem:[%s450 + $0x58] sm:$0xff]
        %v531 = vld [vmem:[%s450 + $0x60] sm:$0xff]
        %v532 = vld [vmem:[%s450 + $0x68] sm:$0xff]
        %v533 = vld [vmem:[%s450 + $0x70] sm:$0xff]
        %v534 = vld [vmem:[%s450 + $0x78] sm:$0xff]
        %v535 = vpack.c.bf16 %v520, %v519
        %v536 = vpack.c.bf16 %v522, %v521
        %v537 = vpack.c.bf16 %v524, %v523
        %v538 = vpack.c.bf16 %v526, %v525
        %v539 = vpack.c.bf16 %v528, %v527
        %v540 = vpack.c.bf16 %v530, %v529
        %v541 = vpack.c.bf16 %v532, %v531
        %v542 = vpack.c.bf16 %v534, %v533
        %v559 = vunpack.c.l.b16 %v503
        %v560 = vunpack.c.l.b16 %v504
        %v561 = vunpack.c.l.b16 %v505
        %v562 = vunpack.c.l.b16 %v506
        %v563 = vunpack.c.l.b16 %v507
        %v564 = vunpack.c.l.b16 %v508
        %v565 = vunpack.c.l.b16 %v509
        %v566 = vunpack.c.l.b16 %v510
        %v567 = vunpack.c.l.b16 %v511
        %v568 = vunpack.c.l.b16 %v512
        %v569 = vunpack.c.l.b16 %v513
        %v570 = vunpack.c.l.b16 %v514
        %v571 = vunpack.c.l.b16 %v515
        %v572 = vunpack.c.l.b16 %v516
        %v573 = vunpack.c.l.b16 %v517
        %v574 = vunpack.c.l.b16 %v518
        %v575 = vpack.c.b16 %v560, %v559
        %v576 = vpack.c.b16 %v562, %v561
        %v577 = vpack.c.b16 %v564, %v563
        %v578 = vpack.c.b16 %v566, %v565
        %v579 = vpack.c.b16 %v568, %v567
        %v580 = vpack.c.b16 %v570, %v569
        %v581 = vpack.c.b16 %v572, %v571
        %v582 = vpack.c.b16 %v574, %v573
        %591 = vmatprep.subr.bf16.mxu0 0
        %592 = vmatpush1.bf16.msra.mxu0 %v542
        %593 = vmatprep.subr.bf16.mxu0 0
        %594 = vmatpush1.bf16.msra.mxu0 %v541
        %595 = vmatprep.subr.bf16.mxu0 0
        %596 = vmatpush1.bf16.msra.mxu0 %v540
        %597 = vmatprep.subr.bf16.mxu0 0
        %598 = vmatpush1.bf16.msra.mxu0 %v539
        %599 = vmatprep.subr.bf16.mxu0 0
        %600 = vmatpush1.bf16.msra.mxu0 %v538
        %601 = vmatprep.subr.bf16.mxu0 0
        %602 = vmatpush1.bf16.msra.mxu0 %v537
        %603 = vmatprep.subr.bf16.mxu0 0
        %604 = vmatpush1.bf16.msra.mxu0 %v536
        %605 = vmatprep.subr.bf16.mxu0 0
        %606 = vmatpush1.bf16.msra.mxu0 %v535
        %607 = vmatprep.subr.bf16.mxu0 0
        %608 = vmatpush2.bf16.msra.mxu0 0
        %609 = vmatprep.subr.bf16.mxu0 0
        %610 = vmatpush2.bf16.msra.mxu0 0
        %611 = vmatprep.subr.bf16.mxu0 0
        %612 = vmatpush2.bf16.msra.mxu0 0
        %613 = vmatprep.subr.bf16.mxu0 0
        %614 = vmatpush2.bf16.msra.mxu0 0
        %615 = vmatprep.subr.bf16.mxu0 0
        %616 = vmatpush2.bf16.msra.mxu0 0
        %617 = vmatprep.subr.bf16.mxu0 0
        %618 = vmatpush2.bf16.msra.mxu0 0
        %619 = vmatprep.subr.bf16.mxu0 0
        %620 = vmatpush2.bf16.msra.mxu0 0
        %621 = vmatprep.subr.bf16.mxu0 0
        %622 = vmatpush2.bf16.msra.mxu0 0
        %623 = vmatprep.mubr.bf16.mxu0 0
        %624 = vmatmul.mubr.bf16.gmra.mxu0 %v575
        %v625 = vpop.f32.mrf.mxu0
        %v626 = vadd.f32 0.0, %v625
        %v627 = vpop.f32.mrf.mxu0
        %v628 = vpop.f32.mrf.mxu0
        %v629 = vadd.f32 0.0, %v628
        %v630 = vpop.f32.mrf.mxu0
        %631 = vmatprep.mubr.bf16.mxu0 0
        %632 = vmatmul.mubr.bf16.gmra.mxu0 %v576
        %v633 = vpop.f32.mrf.mxu0
        %v634 = vadd.f32 0.0, %v633
        %v635 = vpop.f32.mrf.mxu0
        %v636 = vpop.f32.mrf.mxu0
        %v637 = vadd.f32 0.0, %v636
        %v638 = vpop.f32.mrf.mxu0
        %639 = vmatprep.mubr.bf16.mxu0 0
        %640 = vmatmul.mubr.bf16.gmra.mxu0 %v577
        %v641 = vpop.f32.mrf.mxu0
        %v642 = vadd.f32 0.0, %v641
        %v643 = vpop.f32.mrf.mxu0
        %v644 = vpop.f32.mrf.mxu0
        %v645 = vadd.f32 0.0, %v644
        %v646 = vpop.f32.mrf.mxu0
        %647 = vmatprep.mubr.bf16.mxu0 0
        %648 = vmatmul.mubr.bf16.gmra.mxu0 %v578
        %v649 = vpop.f32.mrf.mxu0
        %v650 = vadd.f32 0.0, %v649
        %v651 = vpop.f32.mrf.mxu0
        %v652 = vpop.f32.mrf.mxu0
        %v653 = vadd.f32 0.0, %v652
        %v654 = vpop.f32.mrf.mxu0
        %655 = vmatprep.mubr.bf16.mxu0 0
        %656 = vmatmul.mubr.bf16.gmra.mxu0 %v579
        %v657 = vpop.f32.mrf.mxu0
        %v658 = vadd.f32 0.0, %v657
        %v659 = vpop.f32.mrf.mxu0
        %v660 = vpop.f32.mrf.mxu0
        %v661 = vadd.f32 0.0, %v660
        %v662 = vpop.f32.mrf.mxu0
        %663 = vmatprep.mubr.bf16.mxu0 0
        %664 = vmatmul.mubr.bf16.gmra.mxu0 %v580
        %v665 = vpop.f32.mrf.mxu0
        %v666 = vadd.f32 0.0, %v665
        %v667 = vpop.f32.mrf.mxu0
        %v668 = vpop.f32.mrf.mxu0
        %v669 = vadd.f32 0.0, %v668
        %v670 = vpop.f32.mrf.mxu0
        %671 = vmatprep.mubr.bf16.mxu0 0
        %672 = vmatmul.mubr.bf16.gmra.mxu0 %v581
        %v673 = vpop.f32.mrf.mxu0
        %v674 = vadd.f32 0.0, %v673
        %v675 = vpop.f32.mrf.mxu0
        %v676 = vpop.f32.mrf.mxu0
        %v677 = vadd.f32 0.0, %v676
        %v678 = vpop.f32.mrf.mxu0
        %679 = vmatprep.mubr.bf16.mxu0 0
        %680 = vmatmul.mubr.bf16.gmra.mxu0 %v582
        %v681 = vpop.f32.mrf.mxu0
        %v682 = vadd.f32 0.0, %v681
        %v683 = vpop.f32.mrf.mxu0
        %v684 = vpop.f32.mrf.mxu0
        %v685 = vadd.f32 0.0, %v684
        %v686 = vpop.f32.mrf.mxu0
        %687 = vdwg.mxu0
        %v688 = vadd.f32 %v487, %v626
        %v689 = vadd.f32 %v488, %v629
        %v690 = vadd.f32 %v489, %v634
        %v691 = vadd.f32 %v490, %v637
        %v692 = vadd.f32 %v491, %v642
        %v693 = vadd.f32 %v492, %v645
        %v694 = vadd.f32 %v493, %v650
        %v695 = vadd.f32 %v494, %v653
        %v696 = vadd.f32 %v495, %v658
        %v697 = vadd.f32 %v496, %v661
        %v698 = vadd.f32 %v497, %v666
        %v699 = vadd.f32 %v498, %v669
        %v700 = vadd.f32 %v499, %v674
        %v701 = vadd.f32 %v500, %v677
        %v702 = vadd.f32 %v501, %v682
        %v703 = vadd.f32 %v502, %v685
        %vm704 = vcmask 261120
        %705 = vst.msk [vmem:[#allocation2] sm:$0xff] %vm704, %v688
        %706 = vst.msk [vmem:[#allocation2 + $0x8] sm:$0xff] %vm704, %v689
        %707 = vst.msk [vmem:[#allocation2 + $0x10] sm:$0xff] %vm704, %v690
        %708 = vst.msk [vmem:[#allocation2 + $0x18] sm:$0xff] %vm704, %v691
        %709 = vst.msk [vmem:[#allocation2 + $0x20] sm:$0xff] %vm704, %v692
        %710 = vst.msk [vmem:[#allocation2 + $0x28] sm:$0xff] %vm704, %v693
        %711 = vst.msk [vmem:[#allocation2 + $0x30] sm:$0xff] %vm704, %v694
        %712 = vst.msk [vmem:[#allocation2 + $0x38] sm:$0xff] %vm704, %v695
        %713 = vst.msk [vmem:[#allocation2 + $0x40] sm:$0xff] %vm704, %v696
        %714 = vst.msk [vmem:[#allocation2 + $0x48] sm:$0xff] %vm704, %v697
        %715 = vst.msk [vmem:[#allocation2 + $0x50] sm:$0xff] %vm704, %v698
        %716 = vst.msk [vmem:[#allocation2 + $0x58] sm:$0xff] %vm704, %v699
        %717 = vst.msk [vmem:[#allocation2 + $0x60] sm:$0xff] %vm704, %v700
        %718 = vst.msk [vmem:[#allocation2 + $0x68] sm:$0xff] %vm704, %v701
        %719 = vst.msk [vmem:[#allocation2 + $0x70] sm:$0xff] %vm704, %v702
        %720 = vst.msk [vmem:[#allocation2 + $0x78] sm:$0xff] %vm704, %v703
        %p721 = scmp.eq.s32.totalorder %s26, 1
        // Predicated region
        $region94: #{tpu_custom_call.1} parent=84 // pred_check
          %p722 = pneg %p721
        $region95: #{tpu_custom_call.1} parent=84 // pred_check_branch
          %724 = sbr.rel (%p722) target = $region97
        $region96: #{tpu_custom_call.1} parent=84 // pred_region
          %v725 = vld [vmem:[#allocation2] sm:$0xff]
          %v726 = vld [vmem:[#allocation2 + $0x8] sm:$0xff]
          %v727 = vld [vmem:[#allocation2 + $0x10] sm:$0xff]
          %v728 = vld [vmem:[#allocation2 + $0x18] sm:$0xff]
          %v729 = vld [vmem:[#allocation2 + $0x20] sm:$0xff]
          %v730 = vld [vmem:[#allocation2 + $0x28] sm:$0xff]
          %v731 = vld [vmem:[#allocation2 + $0x30] sm:$0xff]
          %v732 = vld [vmem:[#allocation2 + $0x38] sm:$0xff]
          %v733 = vld [vmem:[#allocation2 + $0x40] sm:$0xff]
          %v734 = vld [vmem:[#allocation2 + $0x48] sm:$0xff]
          %v735 = vld [vmem:[#allocation2 + $0x50] sm:$0xff]
          %v736 = vld [vmem:[#allocation2 + $0x58] sm:$0xff]
          %v737 = vld [vmem:[#allocation2 + $0x60] sm:$0xff]
          %v738 = vld [vmem:[#allocation2 + $0x68] sm:$0xff]
          %v739 = vld [vmem:[#allocation2 + $0x70] sm:$0xff]
          %v740 = vld [vmem:[#allocation2 + $0x78] sm:$0xff]
          %v741 = vld [vmem:[%s462] sm:$0xff]
          %v742 = vld [vmem:[%s462 + $0x8] sm:$0xff]
          %v743 = vld [vmem:[%s462 + $0x10] sm:$0xff]
          %v744 = vld [vmem:[%s462 + $0x18] sm:$0xff]
          %v745 = vld [vmem:[%s462 + $0x20] sm:$0xff]
          %v746 = vld [vmem:[%s462 + $0x28] sm:$0xff]
          %v747 = vld [vmem:[%s462 + $0x30] sm:$0xff]
          %v748 = vld [vmem:[%s462 + $0x38] sm:$0xff]
          %v749 = vld [vmem:[%s462 + $0x40] sm:$0xff]
          %v750 = vld [vmem:[%s462 + $0x48] sm:$0xff]
          %v751 = vld [vmem:[%s462 + $0x50] sm:$0xff]
          %v752 = vld [vmem:[%s462 + $0x58] sm:$0xff]
          %v753 = vld [vmem:[%s462 + $0x60] sm:$0xff]
          %v754 = vld [vmem:[%s462 + $0x68] sm:$0xff]
          %v755 = vld [vmem:[%s462 + $0x70] sm:$0xff]
          %v756 = vld [vmem:[%s462 + $0x78] sm:$0xff]
          %758 = vset.pattern.permute.xlu0 0
          %759 = vperm.xlu0 %758, %v741
          %v760 = vpop.permute.xlu0 %759
          %763 = vset.pattern.permute.xlu0 0
          %764 = vperm.xlu0 %763, %v742
          %v765 = vpop.permute.xlu0 %764
          %768 = vset.pattern.permute.xlu0 0
          %769 = vperm.xlu0 %768, %v743
          %v770 = vpop.permute.xlu0 %769
          %773 = vset.pattern.permute.xlu0 0
          %774 = vperm.xlu0 %773, %v744
          %v775 = vpop.permute.xlu0 %774
          %778 = vset.pattern.permute.xlu0 0
          %779 = vperm.xlu0 %778, %v745
          %v780 = vpop.permute.xlu0 %779
          %783 = vset.pattern.permute.xlu0 0
          %784 = vperm.xlu0 %783, %v746
          %v785 = vpop.permute.xlu0 %784
          %788 = vset.pattern.permute.xlu0 0
          %789 = vperm.xlu0 %788, %v747
          %v790 = vpop.permute.xlu0 %789
          %793 = vset.pattern.permute.xlu0 0
          %794 = vperm.xlu0 %793, %v748
          %v795 = vpop.permute.xlu0 %794
          %798 = vset.pattern.permute.xlu0 0
          %799 = vperm.xlu0 %798, %v749
          %v800 = vpop.permute.xlu0 %799
          %803 = vset.pattern.permute.xlu0 0
          %804 = vperm.xlu0 %803, %v750
          %v805 = vpop.permute.xlu0 %804
          %808 = vset.pattern.permute.xlu0 0
          %809 = vperm.xlu0 %808, %v751
          %v810 = vpop.permute.xlu0 %809
          %813 = vset.pattern.permute.xlu0 0
          %814 = vperm.xlu0 %813, %v752
          %v815 = vpop.permute.xlu0 %814
          %818 = vset.pattern.permute.xlu0 0
          %819 = vperm.xlu0 %818, %v753
          %v820 = vpop.permute.xlu0 %819
          %823 = vset.pattern.permute.xlu0 0
          %824 = vperm.xlu0 %823, %v754
          %v825 = vpop.permute.xlu0 %824
          %828 = vset.pattern.permute.xlu0 0
          %829 = vperm.xlu0 %828, %v755
          %v830 = vpop.permute.xlu0 %829
          %833 = vset.pattern.permute.xlu0 0
          %834 = vperm.xlu0 %833, %v756
          %v835 = vpop.permute.xlu0 %834
          %v837 = vmul.f32 %v725, %v760
          %v838 = vmul.f32 %v726, %v765
          %v839 = vmul.f32 %v727, %v770
          %v840 = vmul.f32 %v728, %v775
          %v841 = vmul.f32 %v729, %v780
          %v842 = vmul.f32 %v730, %v785
          %v843 = vmul.f32 %v731, %v790
          %v844 = vmul.f32 %v732, %v795
          %v845 = vmul.f32 %v733, %v800
          %v846 = vmul.f32 %v734, %v805
          %v847 = vmul.f32 %v735, %v810
          %v848 = vmul.f32 %v736, %v815
          %v849 = vmul.f32 %v737, %v820
          %v850 = vmul.f32 %v738, %v825
          %v851 = vmul.f32 %v739, %v830
          %v852 = vmul.f32 %v740, %v835
          %v853 = vpack.c.bf16 %v838, %v837
          %v854 = vpack.c.bf16 %v840, %v839
          %v855 = vpack.c.bf16 %v842, %v841
          %v856 = vpack.c.bf16 %v844, %v843
          %v857 = vpack.c.bf16 %v846, %v845
          %v858 = vpack.c.bf16 %v848, %v847
          %v859 = vpack.c.bf16 %v850, %v849
          %v860 = vpack.c.bf16 %v852, %v851
          %v861 = vld [vmem:[%s4] sm:$0xf]
          %v862 = vld [vmem:[%s4 + $0x4] sm:$0xf]
          %v863 = vld [vmem:[%s4 + $0x8] sm:$0xf]
          %v864 = vld [vmem:[%s4 + $0xc] sm:$0xf]
          %v865 = vld [vmem:[%s456] sm:$0xff]
          %v866 = vld [vmem:[%s456 + $0x8] sm:$0xff]
          %v867 = vld [vmem:[%s456 + $0x10] sm:$0xff]
          %v868 = vld [vmem:[%s456 + $0x18] sm:$0xff]
          %v869 = vld [vmem:[%s456 + $0x20] sm:$0xff]
          %v870 = vld [vmem:[%s456 + $0x28] sm:$0xff]
          %v871 = vld [vmem:[%s456 + $0x30] sm:$0xff]
          %v872 = vld [vmem:[%s456 + $0x38] sm:$0xff]
          %v873 = vld [vmem:[%s456 + $0x40] sm:$0xff]
          %v874 = vld [vmem:[%s456 + $0x48] sm:$0xff]
          %v875 = vld [vmem:[%s456 + $0x50] sm:$0xff]
          %v876 = vld [vmem:[%s456 + $0x58] sm:$0xff]
          %v877 = vld [vmem:[%s456 + $0x60] sm:$0xff]
          %v878 = vld [vmem:[%s456 + $0x68] sm:$0xff]
          %v879 = vld [vmem:[%s456 + $0x70] sm:$0xff]
          %v880 = vld [vmem:[%s456 + $0x78] sm:$0xff]
          %v881 = vpack.c.bf16 %v866, %v865
          %v882 = vpack.c.bf16 %v868, %v867
          %v883 = vpack.c.bf16 %v870, %v869
          %v884 = vpack.c.bf16 %v872, %v871
          %v885 = vpack.c.bf16 %v874, %v873
          %v886 = vpack.c.bf16 %v876, %v875
          %v887 = vpack.c.bf16 %v878, %v877
          %v888 = vpack.c.bf16 %v880, %v879
          %v889 = vld [vmem:[%s5] sm:$0xf]
          %v890 = vld [vmem:[%s5 + $0x4] sm:$0xf]
          %v891 = vld [vmem:[%s5 + $0x8] sm:$0xf]
          %v892 = vld [vmem:[%s5 + $0xc] sm:$0xf]
          %v897 = vunpack.c.l.b16 %v889
          %v898 = vunpack.c.l.b16 %v890
          %v899 = vunpack.c.l.b16 %v891
          %v900 = vunpack.c.l.b16 %v892
          %v901 = vpack.c.b16 %v898, %v897
          %v902 = vpack.c.b16 %v900, %v899
          %v906 = vsel %vm704, %v881, 0
          %v909 = vsel %vm704, %v882, 0
          %v912 = vsel %vm704, %v883, 0
          %v915 = vsel %vm704, %v884, 0
          %v918 = vsel %vm704, %v885, 0
          %v921 = vsel %vm704, %v886, 0
          %v924 = vsel %vm704, %v887, 0
          %v927 = vsel %vm704, %v888, 0
          %929 = vmatprep.subr.bf16.mxu0 0
          %930 = vmatpush1.bf16.msra.mxu0 0
          %931 = vmatprep.subr.bf16.mxu0 0
          %932 = vmatpush1.bf16.msra.mxu0 0
          %933 = vmatprep.subr.bf16.mxu0 0
          %934 = vmatpush1.bf16.msra.mxu0 0
          %935 = vmatprep.subr.bf16.mxu0 0
          %936 = vmatpush1.bf16.msra.mxu0 0
          %937 = vmatprep.subr.bf16.mxu0 0
          %938 = vmatpush1.bf16.msra.mxu0 0
          %939 = vmatprep.subr.bf16.mxu0 0
          %940 = vmatpush1.bf16.msra.mxu0 0
          %941 = vmatprep.subr.bf16.mxu0 0
          %942 = vmatpush1.bf16.msra.mxu0 %v902
          %943 = vmatprep.subr.bf16.mxu0 0
          %944 = vmatpush1.bf16.msra.mxu0 %v901
          %945 = vmatprep.subr.bf16.mxu0 0
          %946 = vmatpush2.bf16.msra.mxu0 0
          %947 = vmatprep.subr.bf16.mxu0 0
          %948 = vmatpush2.bf16.msra.mxu0 0
          %949 = vmatprep.subr.bf16.mxu0 0
          %950 = vmatpush2.bf16.msra.mxu0 0
          %951 = vmatprep.subr.bf16.mxu0 0
          %952 = vmatpush2.bf16.msra.mxu0 0
          %953 = vmatprep.subr.bf16.mxu0 0
          %954 = vmatpush2.bf16.msra.mxu0 0
          %955 = vmatprep.subr.bf16.mxu0 0
          %956 = vmatpush2.bf16.msra.mxu0 0
          %957 = vmatprep.subr.bf16.mxu0 0
          %958 = vmatpush2.bf16.msra.mxu0 0
          %959 = vmatprep.subr.bf16.mxu0 0
          %960 = vmatpush2.bf16.msra.mxu0 0
          %961 = vmatprep.mubr.bf16.mxu0 0
          %962 = vmatmul.mubr.bf16.gmra.mxu0 %v906
          %v963 = vpop.f32.mrf.mxu0
          %v964 = vadd.f32 0.0, %v963
          %v965 = vpop.f32.mrf.mxu0
          %v966 = vpop.f32.mrf.mxu0
          %v967 = vadd.f32 0.0, %v966
          %v968 = vpop.f32.mrf.mxu0
          %969 = vmatprep.mubr.bf16.mxu0 0
          %970 = vmatmul.mubr.bf16.gmra.mxu0 %v909
          %v971 = vpop.f32.mrf.mxu0
          %v972 = vadd.f32 0.0, %v971
          %v973 = vpop.f32.mrf.mxu0
          %v974 = vpop.f32.mrf.mxu0
          %v975 = vadd.f32 0.0, %v974
          %v976 = vpop.f32.mrf.mxu0
          %977 = vmatprep.mubr.bf16.mxu0 0
          %978 = vmatmul.mubr.bf16.gmra.mxu0 %v912
          %v979 = vpop.f32.mrf.mxu0
          %v980 = vadd.f32 0.0, %v979
          %v981 = vpop.f32.mrf.mxu0
          %v982 = vpop.f32.mrf.mxu0
          %v983 = vadd.f32 0.0, %v982
          %v984 = vpop.f32.mrf.mxu0
          %985 = vmatprep.mubr.bf16.mxu0 0
          %986 = vmatmul.mubr.bf16.gmra.mxu0 %v915
          %v987 = vpop.f32.mrf.mxu0
          %v988 = vadd.f32 0.0, %v987
          %v989 = vpop.f32.mrf.mxu0
          %v990 = vpop.f32.mrf.mxu0
          %v991 = vadd.f32 0.0, %v990
          %v992 = vpop.f32.mrf.mxu0
          %993 = vmatprep.mubr.bf16.mxu0 0
          %994 = vmatmul.mubr.bf16.gmra.mxu0 %v918
          %v995 = vpop.f32.mrf.mxu0
          %v996 = vadd.f32 0.0, %v995
          %v997 = vpop.f32.mrf.mxu0
          %v998 = vpop.f32.mrf.mxu0
          %v999 = vadd.f32 0.0, %v998
          %v1000 = vpop.f32.mrf.mxu0
          %1001 = vmatprep.mubr.bf16.mxu0 0
          %1002 = vmatmul.mubr.bf16.gmra.mxu0 %v921
          %v1003 = vpop.f32.mrf.mxu0
          %v1004 = vadd.f32 0.0, %v1003
          %v1005 = vpop.f32.mrf.mxu0
          %v1006 = vpop.f32.mrf.mxu0
          %v1007 = vadd.f32 0.0, %v1006
          %v1008 = vpop.f32.mrf.mxu0
          %1009 = vmatprep.mubr.bf16.mxu0 0
          %1010 = vmatmul.mubr.bf16.gmra.mxu0 %v924
          %v1011 = vpop.f32.mrf.mxu0
          %v1012 = vadd.f32 0.0, %v1011
          %v1013 = vpop.f32.mrf.mxu0
          %v1014 = vpop.f32.mrf.mxu0
          %v1015 = vadd.f32 0.0, %v1014
          %v1016 = vpop.f32.mrf.mxu0
          %1017 = vmatprep.mubr.bf16.mxu0 0
          %1018 = vmatmul.mubr.bf16.gmra.mxu0 %v927
          %v1019 = vpop.f32.mrf.mxu0
          %v1020 = vadd.f32 0.0, %v1019
          %v1021 = vpop.f32.mrf.mxu0
          %v1022 = vpop.f32.mrf.mxu0
          %v1023 = vadd.f32 0.0, %v1022
          %v1024 = vpop.f32.mrf.mxu0
          %1025 = vdwg.mxu0
          %v1030 = vunpack.c.l.b16 %v861
          %v1031 = vunpack.c.l.b16 %v862
          %v1032 = vunpack.c.l.b16 %v863
          %v1033 = vunpack.c.l.b16 %v864
          %v1034 = vpack.c.b16 %v1031, %v1030
          %v1035 = vpack.c.b16 %v1033, %v1032
          %v1039 = vsel %vm704, %v853, 0
          %v1042 = vsel %vm704, %v854, 0
          %v1045 = vsel %vm704, %v855, 0
          %v1048 = vsel %vm704, %v856, 0
          %v1051 = vsel %vm704, %v857, 0
          %v1054 = vsel %vm704, %v858, 0
          %v1057 = vsel %vm704, %v859, 0
          %v1060 = vsel %vm704, %v860, 0
          %1062 = vmatprep.subr.bf16.mxu0 0
          %1063 = vmatpush1.bf16.msra.mxu0 0
          %1064 = vmatprep.subr.bf16.mxu0 0
          %1065 = vmatpush1.bf16.msra.mxu0 0
          %1066 = vmatprep.subr.bf16.mxu0 0
          %1067 = vmatpush1.bf16.msra.mxu0 0
          %1068 = vmatprep.subr.bf16.mxu0 0
          %1069 = vmatpush1.bf16.msra.mxu0 0
          %1070 = vmatprep.subr.bf16.mxu0 0
          %1071 = vmatpush1.bf16.msra.mxu0 0
          %1072 = vmatprep.subr.bf16.mxu0 0
          %1073 = vmatpush1.bf16.msra.mxu0 0
          %1074 = vmatprep.subr.bf16.mxu0 0
          %1075 = vmatpush1.bf16.msra.mxu0 %v1035
          %1076 = vmatprep.subr.bf16.mxu0 0
          %1077 = vmatpush1.bf16.msra.mxu0 %v1034
          %1078 = vmatprep.subr.bf16.mxu0 0
          %1079 = vmatpush2.bf16.msra.mxu0 0
          %1080 = vmatprep.subr.bf16.mxu0 0
          %1081 = vmatpush2.bf16.msra.mxu0 0
          %1082 = vmatprep.subr.bf16.mxu0 0
          %1083 = vmatpush2.bf16.msra.mxu0 0
          %1084 = vmatprep.subr.bf16.mxu0 0
          %1085 = vmatpush2.bf16.msra.mxu0 0
          %1086 = vmatprep.subr.bf16.mxu0 0
          %1087 = vmatpush2.bf16.msra.mxu0 0
          %1088 = vmatprep.subr.bf16.mxu0 0
          %1089 = vmatpush2.bf16.msra.mxu0 0
          %1090 = vmatprep.subr.bf16.mxu0 0
          %1091 = vmatpush2.bf16.msra.mxu0 0
          %1092 = vmatprep.subr.bf16.mxu0 0
          %1093 = vmatpush2.bf16.msra.mxu0 0
          %1094 = vmatprep.mubr.bf16.mxu0 0
          %1095 = vmatmul.mubr.bf16.gmra.mxu0 %v1039
          %v1096 = vpop.f32.mrf.mxu0
          %v1097 = vadd.f32 %v964, %v1096
          %v1098 = vpop.f32.mrf.mxu0
          %v1099 = vpop.f32.mrf.mxu0
          %v1100 = vadd.f32 %v967, %v1099
          %v1101 = vpop.f32.mrf.mxu0
          %1102 = vmatprep.mubr.bf16.mxu0 0
          %1103 = vmatmul.mubr.bf16.gmra.mxu0 %v1042
          %v1104 = vpop.f32.mrf.mxu0
          %v1105 = vadd.f32 %v972, %v1104
          %v1106 = vpop.f32.mrf.mxu0
          %v1107 = vpop.f32.mrf.mxu0
          %v1108 = vadd.f32 %v975, %v1107
          %v1109 = vpop.f32.mrf.mxu0
          %1110 = vmatprep.mubr.bf16.mxu0 0
          %1111 = vmatmul.mubr.bf16.gmra.mxu0 %v1045
          %v1112 = vpop.f32.mrf.mxu0
          %v1113 = vadd.f32 %v980, %v1112
          %v1114 = vpop.f32.mrf.mxu0
          %v1115 = vpop.f32.mrf.mxu0
          %v1116 = vadd.f32 %v983, %v1115
          %v1117 = vpop.f32.mrf.mxu0
          %1118 = vmatprep.mubr.bf16.mxu0 0
          %1119 = vmatmul.mubr.bf16.gmra.mxu0 %v1048
          %v1120 = vpop.f32.mrf.mxu0
          %v1121 = vadd.f32 %v988, %v1120
          %v1122 = vpop.f32.mrf.mxu0
          %v1123 = vpop.f32.mrf.mxu0
          %v1124 = vadd.f32 %v991, %v1123
          %v1125 = vpop.f32.mrf.mxu0
          %1126 = vmatprep.mubr.bf16.mxu0 0
          %1127 = vmatmul.mubr.bf16.gmra.mxu0 %v1051
          %v1128 = vpop.f32.mrf.mxu0
          %v1129 = vadd.f32 %v996, %v1128
          %v1130 = vpop.f32.mrf.mxu0
          %v1131 = vpop.f32.mrf.mxu0
          %v1132 = vadd.f32 %v999, %v1131
          %v1133 = vpop.f32.mrf.mxu0
          %1134 = vmatprep.mubr.bf16.mxu0 0
          %1135 = vmatmul.mubr.bf16.gmra.mxu0 %v1054
          %v1136 = vpop.f32.mrf.mxu0
          %v1137 = vadd.f32 %v1004, %v1136
          %v1138 = vpop.f32.mrf.mxu0
          %v1139 = vpop.f32.mrf.mxu0
          %v1140 = vadd.f32 %v1007, %v1139
          %v1141 = vpop.f32.mrf.mxu0
          %1142 = vmatprep.mubr.bf16.mxu0 0
          %1143 = vmatmul.mubr.bf16.gmra.mxu0 %v1057
          %v1144 = vpop.f32.mrf.mxu0
          %v1145 = vadd.f32 %v1012, %v1144
          %v1146 = vpop.f32.mrf.mxu0
          %v1147 = vpop.f32.mrf.mxu0
          %v1148 = vadd.f32 %v1015, %v1147
          %v1149 = vpop.f32.mrf.mxu0
          %1150 = vmatprep.mubr.bf16.mxu0 0
          %1151 = vmatmul.mubr.bf16.gmra.mxu0 %v1060
          %v1152 = vpop.f32.mrf.mxu0
          %v1153 = vadd.f32 %v1020, %v1152
          %v1154 = vpop.f32.mrf.mxu0
          %v1155 = vpop.f32.mrf.mxu0
          %v1156 = vadd.f32 %v1023, %v1155
          %v1157 = vpop.f32.mrf.mxu0
          %1158 = vdwg.mxu0
          %v1159 = vld [vmem:[%s6] sm:$0x1]
          %v1161 = vlaneseq
          %v1162 = vshrl.u32 %v1161, 7
          %v1163 = vsub.s32 0, %v1162
          %v1164 = vrot.slane %v1159, %v1163
          %v1166 = vadd.f32 %v1097, %v1164
          %v1167 = vadd.f32 %v1100, %v1164
          %v1168 = vadd.f32 %v1105, %v1164
          %v1169 = vadd.f32 %v1108, %v1164
          %v1170 = vadd.f32 %v1113, %v1164
          %v1171 = vadd.f32 %v1116, %v1164
          %v1172 = vadd.f32 %v1121, %v1164
          %v1173 = vadd.f32 %v1124, %v1164
          %v1174 = vadd.f32 %v1129, %v1164
          %v1175 = vadd.f32 %v1132, %v1164
          %v1176 = vadd.f32 %v1137, %v1164
          %v1177 = vadd.f32 %v1140, %v1164
          %v1178 = vadd.f32 %v1145, %v1164
          %v1179 = vadd.f32 %v1148, %v1164
          %v1180 = vadd.f32 %v1153, %v1164
          %v1181 = vadd.f32 %v1156, %v1164
          %v1182 = vmax.f32 %v1166, 0.0
          %v1183 = vmax.f32 %v1167, 0.0
          %v1184 = vmax.f32 %v1168, 0.0
          %v1185 = vmax.f32 %v1169, 0.0
          %v1186 = vmax.f32 %v1170, 0.0
          %v1187 = vmax.f32 %v1171, 0.0
          %v1188 = vmax.f32 %v1172, 0.0
          %v1189 = vmax.f32 %v1173, 0.0
          %v1190 = vmax.f32 %v1174, 0.0
          %v1191 = vmax.f32 %v1175, 0.0
          %v1192 = vmax.f32 %v1176, 0.0
          %v1193 = vmax.f32 %v1177, 0.0
          %v1194 = vmax.f32 %v1178, 0.0
          %v1195 = vmax.f32 %v1179, 0.0
          %v1196 = vmax.f32 %v1180, 0.0
          %v1197 = vmax.f32 %v1181, 0.0
          %1198 = vst [vmem:[%s444] sm:$0xff] %v1182
          %1199 = vst [vmem:[%s444 + $0x8] sm:$0xff] %v1183
          %1200 = vst [vmem:[%s444 + $0x10] sm:$0xff] %v1184
          %1201 = vst [vmem:[%s444 + $0x18] sm:$0xff] %v1185
          %1202 = vst [vmem:[%s444 + $0x20] sm:$0xff] %v1186
          %1203 = vst [vmem:[%s444 + $0x28] sm:$0xff] %v1187
          %1204 = vst [vmem:[%s444 + $0x30] sm:$0xff] %v1188
          %1205 = vst [vmem:[%s444 + $0x38] sm:$0xff] %v1189
          %1206 = vst [vmem:[%s444 + $0x40] sm:$0xff] %v1190
          %1207 = vst [vmem:[%s444 + $0x48] sm:$0xff] %v1191
          %1208 = vst [vmem:[%s444 + $0x50] sm:$0xff] %v1192
          %1209 = vst [vmem:[%s444 + $0x58] sm:$0xff] %v1193
          %1210 = vst [vmem:[%s444 + $0x60] sm:$0xff] %v1194
          %1211 = vst [vmem:[%s444 + $0x68] sm:$0xff] %v1195
          %1212 = vst [vmem:[%s444 + $0x70] sm:$0xff] %v1196
          %1213 = vst [vmem:[%s444 + $0x78] sm:$0xff] %v1197
        $region97: #{tpu_custom_call.1} parent=84 // pred_fallthru
          _
        %s1214 = sand.u32 %s210, 1
        %s1215 = scalar_lea.sflag [#allocation5], %s1214
        %s1216 = sand.u32 %s210, 1
        %s1217 = smul.addr %s1216, 128
        %s1218 = scalar_lea.vmem [#allocation4], %s1217
        // Predicated region
        $region98: #{tpu_custom_call.1} parent=84 // pred_check
          %p1219 = pneg %p220
        $region99: #{tpu_custom_call.1} parent=84 // pred_check_branch
          %1221 = sbr.rel (%p1219) target = $region101
        $region100: #{tpu_custom_call.1} parent=84 // pred_region
          %s1222 = smul.u32 16, %s25
          %s1224 = ssub.s32 2048, 2048
          %1225 = vsyncadd %s1215, %s1224
          %s1226 = smul.addr %s1222, 128
          %s1227 = scalar_lea.hbm %s7, %s1226
          %s1228 = sshll.u32 %s1218, 4
          %s1229 = int_to_ptr.vmem [resolvable:$true] %s1228
          %1234 = dma.vmem_to_hbm [thread:$0]  %s1229, 2048, %s1227, %s1215, 128, 128, 8
        $region101: #{tpu_custom_call.1} parent=84 // pred_fallthru
          _
      $region85: #{tpu_custom_call.1} parent=5 // pred_fallthru
        _
      %p1235 = scmp.le.s32.totalorder 2, %s16
      // Predicated region
      $region102: #{tpu_custom_call.1} parent=5 // pred_check
        %p1236 = pneg %p1235
      $region103: #{tpu_custom_call.1} parent=5 // pred_check_branch
        %1238 = sbr.rel (%p1236) target = $region105
      $region104: #{tpu_custom_call.1} parent=5 // pred_region
        %s1239 = ssub.s32 %s16, 2
        // Predicated region
        $region106: #{tpu_custom_call.1} parent=104 // pred_check
          %p1240 = pneg %p226
        $region107: #{tpu_custom_call.1} parent=104 // pred_check_branch
          %1242 = sbr.rel (%p1240) target = $region109
        $region108: #{tpu_custom_call.1} parent=104 // pred_region
          %s1243 = sand.u32 %s211, 1
          %s1244 = scalar_lea.sflag [#allocation5], %s1243
          %s1245 = sand.u32 %s211, 1
          %s1246 = smul.addr %s1245, 128
          %s1247 = scalar_lea.vmem [#allocation4], %s1246
          %1248 = dma.done %s1244, 2048
        $region109: #{tpu_custom_call.1} parent=104 // pred_fallthru
          _
      $region105: #{tpu_custom_call.1} parent=5 // pred_fallthru
        _
    $region6: #{tpu_custom_call.1} parent=1 // loop_footer
      %s20 = sadd.s32 1, %s16
    $region7: #{tpu_custom_call.1} parent=1 // loop_footer_branch
      %15 = sbr.rel target = $region3
    $region8: #{tpu_custom_call.1} parent=1 // loop_exit
      _
    %1249 = vsyncpa [#allocation5], 1
    %s1250 = scalar_lea.sflag [#allocation5], 1
    %1251 = vsyncpa %s1250, 1

</llo_original>
